<compile_context>
chip_gen: v7x
topology: tpu7x:2x2x1
jax: 0.10.0
libtpu: 0.0.40
codegen_flags: <defaults>
</compile_context>

<pallas_src>
import jax
import jax.numpy as jnp
from jax.experimental import pallas as pl
from jax.experimental.pallas import tpu as pltpu

K = 3
CONFIG = {
    "batch_size": 2,            # small example batch
    "d_model": 32,
    "n_heads": 8,
    "context_window": K ** 2,   # = 9
    "vocab_size": 128,          # small synthetic vocab
}

H_PAD = 128  # lane-dense hidden width


def _round_up(n, m):
    return ((n + m - 1) // m) * m


def _fused_kernel(idx_ref, embw1b_ref, w2_ref, b2_ref, o_ref):
    # idx_ref:    (tm, 1) int32
    # embw1b_ref: (vocab, h_pad) bf16   (= emb @ W1 + b1, zero-padded to h_pad)
    # w2_ref:     (h_pad, vocab) bf16   (rows >= d_hidden are zero)
    # b2_ref:     (1, vocab) f32
    # o_ref:      (tm, vocab) f32
    ids = idx_ref[...]                                    # (tm, 1)
    tm = ids.shape[0]
    vocab = embw1b_ref.shape[0]

    # Embedding gather + first Linear + b1, all pre-folded into EMBW1B.
    # The one-hot matmul picks exactly one row (single exact product, f32 acc).
    col = jax.lax.broadcasted_iota(jnp.int32, (tm, vocab), 1)
    onehot = (col == ids).astype(embw1b_ref.dtype)        # (tm, vocab) bf16
    h = jnp.dot(onehot, embw1b_ref[...],
                preferred_element_type=jnp.float32)       # (tm, h_pad) f32
    h = jnp.maximum(h, 0.0)                               # ReLU in f32 on the VPU

    logits = jnp.dot(h.astype(w2_ref.dtype), w2_ref[...],
                     preferred_element_type=jnp.float32) + b2_ref[...]
    o_ref[...] = logits


def prepare_fused_params(emb, w1, b1, w2, b2):
    """One-time (init-path) weight prep: fold emb@W1+b1, pad hidden dim, cast bf16."""
    vocab, d_model = emb.shape
    d_hidden = w1.shape[1]
    h_pad = max(H_PAD, _round_up(d_hidden, 128))

    embw1b = jnp.dot(emb, w1, precision="highest") + b1        # (vocab, d_hidden) f32
    embw1b = jnp.pad(embw1b, ((0, 0), (0, h_pad - d_hidden)))  # zero cols -> ReLU(0)=0
    w2p = jnp.pad(w2, ((0, h_pad - d_hidden), (0, 0)))         # zero rows -> inert
    return (embw1b.astype(jnp.bfloat16),
            w2p.astype(jnp.bfloat16),
            b2.astype(jnp.float32))


def simple_model_forward(idx, embw1b, w2p, b2):
    """idx: int32 (B, S). Fused params from prepare_fused_params. Returns (B, S, vocab) f32."""
    B, S = idx.shape
    vocab, h_pad = embw1b.shape

    # Token-tile selection (sublane-aligned). 256 fills the v6e/v7x MXU once T is
    # large; for small-but-nontrivial T split into 2 tiles so the parallel axis
    # can shard across v7x's 2 TensorCores.
    T = B * S
    t_pad = _round_up(T, 8)
    if t_pad >= 512:
        tm = 256
    elif t_pad >= 16:
        tm = _round_up((t_pad + 1) // 2, 8)
    else:
        tm = t_pad
    t_pad = _round_up(t_pad, tm)

    idx_flat = idx.reshape(-1, 1).astype(jnp.int32)
    idx_pad = jnp.pad(idx_flat, ((0, t_pad - T), (0, 0)))   # pad rows use token 0

    grid = (t_pad // tm,)

    cost = pl.CostEstimate(
        flops=2 * t_pad * (vocab * h_pad + h_pad * vocab),
        transcendentals=0,
        bytes_accessed=(idx_pad.size * 4 + embw1b.size * 2 + w2p.size * 2
                        + b2.size * 4 + t_pad * vocab * 4),
    )

    resident = dict(pipeline_mode=pl.Buffered(1))   # constant operands: single-buffer

    out = pl.pallas_call(
        _fused_kernel,
        out_shape=jax.ShapeDtypeStruct((t_pad, vocab), jnp.float32),
        grid_spec=pltpu.PrefetchScalarGridSpec(
            num_scalar_prefetch=0,
            grid=grid,
            in_specs=[
                pl.BlockSpec((tm, 1), lambda t: (t, 0)),                     # idx
                pl.BlockSpec((vocab, h_pad), lambda t: (0, 0), **resident),  # EMBW1B
                pl.BlockSpec((h_pad, vocab), lambda t: (0, 0), **resident),  # W2
                pl.BlockSpec((1, vocab), lambda t: (0, 0), **resident),      # b2
            ],
            out_specs=pl.BlockSpec((tm, vocab), lambda t: (t, 0)),
        ),
        compiler_params=pltpu.CompilerParams(
            dimension_semantics=("parallel",),     # token tiles shard across TCs (v7x)
            vmem_limit_bytes=32 * 1024 * 1024,     # explicit (v5e default is only 16 MiB)
        ),
        cost_estimate=cost,
    )(idx_pad, embw1b, w2p, b2)

    return out[:T].reshape(B, S, vocab)


def init_params(config, key):
    """Deterministic parameter init matching nn.Embedding + 2x nn.Linear shapes."""
    d = config["d_model"]
    v = config["vocab_size"]
    k_emb, k_w1, k_b1, k_w2, k_b2 = jax.random.split(key, 5)
    emb = jax.random.normal(k_emb, (v, d), jnp.float32)
    # nn.Linear(d, d): stored (in, out) so the forward does x @ W
    w1 = jax.random.normal(k_w1, (d, d), jnp.float32) * (1.0 / jnp.sqrt(d))
    b1 = jax.random.normal(k_b1, (1, d), jnp.float32) * 0.01
    # nn.Linear(d, vocab)
    w2 = jax.random.normal(k_w2, (d, v), jnp.float32) * (1.0 / jnp.sqrt(d))
    b2 = jax.random.normal(k_b2, (1, v), jnp.float32) * 0.01
    return emb, w1, b1, w2, b2


if __name__ == "__main__":
    key = jax.random.PRNGKey(0)
    k_params, k_idx = jax.random.split(key)

    emb, w1, b1, w2, b2 = init_params(CONFIG, k_params)

    B = CONFIG["batch_size"]
    S = CONFIG["context_window"]
    V = CONFIG["vocab_size"]
    idx = jax.random.randint(k_idx, (B, S), 0, V, dtype=jnp.int32)

    # One-time parameter prep (hoisted out of the per-call hot path).
    fused = prepare_fused_params(emb, w1, b1, w2, b2)
    fused = tuple(jax.block_until_ready(p) for p in fused)

    forward = jax.jit(simple_model_forward)
    logits = forward(idx, *fused)
    logits = jax.block_until_ready(logits)

    # --- Correctness checks -------------------------------------------------
    # (a) bf16-mirrored reference matching the kernel arithmetic (tight).
    embw1b_q = (jnp.dot(emb, w1, precision="highest") + b1).astype(jnp.bfloat16).astype(jnp.float32)
    h_q = jnp.maximum(jnp.take(embw1b_q, idx.reshape(-1), axis=0), 0.0)
    ref_q = (jnp.dot(h_q.astype(jnp.bfloat16).astype(jnp.float32),
                     w2.astype(jnp.bfloat16).astype(jnp.float32),
                     precision="highest") + b2).reshape(B, S, V)

    # (b) f32 module-semantics reference (loose: kernel uses bf16 MXU operands).
    x_g = jnp.take(emb, idx.reshape(-1), axis=0)
    h_f32 = jnp.maximum(jnp.dot(x_g, w1, precision="highest") + b1, 0.0)
    ref_f32 = (jnp.dot(h_f32, w2, precision="highest") + b2).reshape(B, S, V)

    assert logits.shape == (B, S, V)
    assert jnp.allclose(logits, ref_q, atol=1e-3, rtol=1e-3), "bf16-mirrored check failed"
    assert jnp.allclose(logits, ref_f32, atol=1e-1, rtol=5e-2), "f32 reference check failed"

    # TODO(synk): targets/cross-entropy loss branch not implemented (forward-only logits path).
    print("KERNEL_OK")
</pallas_src>

<mosaic_0001>
module attributes {stable_mosaic.version = 11 : i64} {
  func.func @_fused_kernel(%arg0: i32, %arg1: memref<16x1xi32, #tpu.memory_space<vmem>>, %arg2: memref<128x128xbf16, #tpu.memory_space<vmem>>, %arg3: memref<128x128xbf16, #tpu.memory_space<vmem>>, %arg4: memref<1x128xf32, #tpu.memory_space<vmem>>, %arg5: memref<16x128xf32, #tpu.memory_space<vmem>>) attributes {dimension_semantics = [#tpu.dimension_semantics<parallel>], iteration_bounds = array<i64: 2>, scalar_prefetch = 0 : i64, scratch_operands = 0 : i64, tpu.core_type = #tpu.core_type<tc>, window_params = [{transform_indices = @transform_0, window_bounds = array<i64: 16, 1>}, {pipeline_mode = #tpu.pipeline_mode<synchronous>, transform_indices = @transform_1, window_bounds = array<i64: 128, 128>}, {pipeline_mode = #tpu.pipeline_mode<synchronous>, transform_indices = @transform_2, window_bounds = array<i64: 128, 128>}, {pipeline_mode = #tpu.pipeline_mode<synchronous>, transform_indices = @transform_3, window_bounds = array<i64: 1, 128>}, {transform_indices = @transform_4, window_bounds = array<i64: 16, 128>}]} {
    %c0 = arith.constant 0 : index
    %c0_0 = arith.constant 0 : index
    %0 = vector.load %arg1[%c0, %c0_0] : memref<16x1xi32, #tpu.memory_space<vmem>>, vector<16x1xi32>
    %1 = tpu.iota {dimensions = array<i32: 1>} : vector<16x128xi32>
    %2 = vector.broadcast %0 : vector<16x1xi32> to vector<16x128xi32>
    %3 = arith.cmpi eq, %1, %2 : vector<16x128xi32>
    %4 = arith.extui %3 : vector<16x128xi1> to vector<16x128xi32>
    %5 = arith.sitofp %4 : vector<16x128xi32> to vector<16x128xf32>
    %6 = arith.truncf %5 : vector<16x128xf32> to vector<16x128xbf16>
    %c0_1 = arith.constant 0 : index
    %c0_2 = arith.constant 0 : index
    %7 = vector.load %arg2[%c0_1, %c0_2] : memref<128x128xbf16, #tpu.memory_space<vmem>>, vector<128x128xbf16>
    %cst = arith.constant dense<0.000000e+00> : vector<16x128xf32>
    %8 = tpu.matmul %6, %7, %cst {dimension_numbers = #tpu.dot_dimension_numbers<[1], [0], [0], [1], [0, 0, 1, 1], [], []>} : vector<16x128xbf16>, vector<128x128xbf16>, vector<16x128xf32> -> vector<16x128xf32>
    %cst_3 = arith.constant 0.000000e+00 : f32
    %9 = vector.broadcast %cst_3 : f32 to vector<16x128xf32>
    %10 = arith.maximumf %8, %9 : vector<16x128xf32>
    %11 = arith.truncf %10 : vector<16x128xf32> to vector<16x128xbf16>
    %c0_4 = arith.constant 0 : index
    %c0_5 = arith.constant 0 : index
    %12 = vector.load %arg3[%c0_4, %c0_5] : memref<128x128xbf16, #tpu.memory_space<vmem>>, vector<128x128xbf16>
    %cst_6 = arith.constant dense<0.000000e+00> : vector<16x128xf32>
    %13 = tpu.matmul %11, %12, %cst_6 {dimension_numbers = #tpu.dot_dimension_numbers<[1], [0], [0], [1], [0, 0, 1, 1], [], []>} : vector<16x128xbf16>, vector<128x128xbf16>, vector<16x128xf32> -> vector<16x128xf32>
    %c0_7 = arith.constant 0 : index
    %c0_8 = arith.constant 0 : index
    %14 = vector.load %arg4[%c0_7, %c0_8] : memref<1x128xf32, #tpu.memory_space<vmem>>, vector<1x128xf32>
    %15 = vector.broadcast %14 : vector<1x128xf32> to vector<16x128xf32>
    %16 = arith.addf %13, %15 : vector<16x128xf32>
    %c0_9 = arith.constant 0 : index
    %c0_10 = arith.constant 0 : index
    %17 = vector.load %arg5[%c0_9, %c0_10] : memref<16x128xf32, #tpu.memory_space<vmem>>, vector<16x128xf32>
    tpu.vector_store %arg5[%c0_9, %c0_10], %16 {strides = array<i32>} : memref<16x128xf32, #tpu.memory_space<vmem>>, vector<16x128xf32>,
    return
  }
  func.func @transform_0(%arg0: i32) -> (i32, i32) {
    %c0_i32 = arith.constant 0 : i32
    %c0_i32_0 = arith.constant 0 : i32
    return %arg0, %c0_i32 : i32, i32
  }
  func.func @transform_1(%arg0: i32) -> (i32, i32) {
    %c0_i32 = arith.constant 0 : i32
    %c0_i32_0 = arith.constant 0 : i32
    %c0_i32_1 = arith.constant 0 : i32
    return %c0_i32, %c0_i32_0 : i32, i32
  }
  func.func @transform_2(%arg0: i32) -> (i32, i32) {
    %c0_i32 = arith.constant 0 : i32
    %c0_i32_0 = arith.constant 0 : i32
    %c0_i32_1 = arith.constant 0 : i32
    return %c0_i32, %c0_i32_0 : i32, i32
  }
  func.func @transform_3(%arg0: i32) -> (i32, i32) {
    %c0_i32 = arith.constant 0 : i32
    %c0_i32_0 = arith.constant 0 : i32
    %c0_i32_1 = arith.constant 0 : i32
    return %c0_i32, %c0_i32_0 : i32, i32
  }
  func.func @transform_4(%arg0: i32) -> (i32, i32) {
    %c0_i32 = arith.constant 0 : i32
    %c0_i32_0 = arith.constant 0 : i32
    return %arg0, %c0_i32 : i32, i32
  }
}

</mosaic_0001>

<llo_original>
// kernel: simple_model_forward.1
$region0: #{simple_model_forward.1}
  #allocation0 [shape = 'u32[]', space=smem, size = 0x4, offset = 0x4, fixed_abs, tag = 'smem constant byte address 0x4 - core index']
  #allocation1 [shape = 'u32[144,128]{1,0:T(1,128)}', space=vmem, size = 0x12000, scoped, tag = 'internal scratch']
  %s0 = inlined_call_operand.vmem [shape: s32[32,1], index: 0, kind: input, shape index: {}]
  %s1 = inlined_call_operand.vmem [shape: bf16[128,128], index: 1, kind: input, shape index: {}]
  %s2 = inlined_call_operand.hbm [shape: bf16[128,128], index: 2, kind: input, shape index: {}]
  %s3 = inlined_call_operand.vmem [shape: f32[1,128], index: 3, kind: input, shape index: {}]
  %s4 = inlined_call_operand.vmem [shape: f32[32,128], index: 4, kind: output, shape index: {}]
  %s5 = sld [smem:[#allocation0]]
  $region53: #{simple_model_forward.1} parent=0
    _
  %s7 = ssub.s32 1, %s5
  %s8 = scalar_select 0, %s7, %s5
  $region1: #{simple_model_forward.1} parent=0
    #allocation2 [shape = 'u8[32768]{0}', space=vmem, size = 0x8000, scoped, tag = 'input window, operand 2, single buffered']
    #allocation3 [shape = 's32[2]{0}', space=sflag, size = 0x8, scoped, tag = 'scoped memory for simple_model_forward.1']
    %9 = vsyncpa [#allocation3], 0
    loop: start=0, step=1, limit=4
    $region2: #{simple_model_forward.1} parent=1 // loop_pre_header
      _
    $region3: #{simple_model_forward.1} parent=1 // loop_header
      %s11 = sphi 0, %s15
      %p12 = scmp.ge.s32.totalorder %s11, 4
      %s21 = sphi 0, %s23
      %s24 = sphi 0, %s21
      %s25 = sphi 0, %s24
      %s41 = sphi 0, %s25
      %s45 = sphi 0, %s45
      %s47 = sphi 0, %s45
      %s48 = sphi 0, %s47
      %s62 = sphi 0, %s48
      %s66 = sphi 0, %s66
      %s68 = sphi 0, %s66
      %s69 = sphi 0, %s68
      %s83 = sphi 0, %s69
      %s87 = sphi 0, %s87
      %s89 = sphi 0, %s87
      %s90 = sphi 0, %s89
      %s104 = sphi 0, %s90
      %s110 = sphi 0, %s112
      %s113 = sphi 0, %s110
      %s114 = sphi 0, %s113
      %s130 = sphi 0, %s114
    $region4: #{simple_model_forward.1} parent=1 // loop_header_branch
      %14 = sbr.rel (%p12) target = $region8
    $region5: #{simple_model_forward.1} parent=1 // loop_body
      %s16 = ssub.s32 %s11, 1
      %s17 = ssub.s32 %s11, 2
      %s18 = sadd.s32 %s11, 1
      %s19 = ssub.s32 %s11, %s18
      %p20 = scmp.eq.s32.totalorder %s19, 0
      %s22 = sadd.s32 %s21, 1
      %s23 = scalar_select %p20, %s21, %s22
      %p26 = pneg %p20
      %p27 = scmp.eq.s32.totalorder %s11, 1
      %p28 = por %p26, %p27
      %p29 = scmp.ne.s32.totalorder %s21, %s24
      %p30 = scmp.eq.s32.totalorder %s11, 0
      %p31 = por %p29, %p30
      %p32 = scmp.ne.s32.totalorder %s21, %s24
      %p33 = scmp.eq.s32.totalorder %s16, 1
      %p34 = por %p32, %p33
      %p35 = scmp.ne.s32.totalorder %s24, %s25
      %p36 = scmp.eq.s32.totalorder %s16, 0
      %p37 = por %p35, %p36
      %p38 = scmp.ne.s32.totalorder %s24, %s25
      %p39 = scmp.eq.s32.totalorder %s17, 1
      %p40 = por %p38, %p39
      %p42 = scmp.ne.s32.totalorder %s25, %s41
      %p43 = scmp.eq.s32.totalorder %s17, 0
      %p44 = por %p42, %p43
      %s46 = sadd.s32 %s45, 1
      %p49 = scmp.eq.s32.totalorder %s11, 1
      %p50 = scmp.ne.s32.totalorder %s45, %s47
      %p51 = scmp.eq.s32.totalorder %s11, 0
      %p52 = por %p50, %p51
      %p53 = scmp.ne.s32.totalorder %s45, %s47
      %p54 = scmp.eq.s32.totalorder %s16, 1
      %p55 = por %p53, %p54
      %p56 = scmp.ne.s32.totalorder %s47, %s48
      %p57 = scmp.eq.s32.totalorder %s16, 0
      %p58 = por %p56, %p57
      %p59 = scmp.ne.s32.totalorder %s47, %s48
      %p60 = scmp.eq.s32.totalorder %s17, 1
      %p61 = por %p59, %p60
      %p63 = scmp.ne.s32.totalorder %s48, %s62
      %p64 = scmp.eq.s32.totalorder %s17, 0
      %p65 = por %p63, %p64
      %s67 = sadd.s32 %s66, 1
      %p70 = scmp.eq.s32.totalorder %s11, 1
      %p71 = scmp.ne.s32.totalorder %s66, %s68
      %p72 = scmp.eq.s32.totalorder %s11, 0
      %p73 = por %p71, %p72
      %p74 = scmp.ne.s32.totalorder %s66, %s68
      %p75 = scmp.eq.s32.totalorder %s16, 1
      %p76 = por %p74, %p75
      %p77 = scmp.ne.s32.totalorder %s68, %s69
      %p78 = scmp.eq.s32.totalorder %s16, 0
      %p79 = por %p77, %p78
      %p80 = scmp.ne.s32.totalorder %s68, %s69
      %p81 = scmp.eq.s32.totalorder %s17, 1
      %p82 = por %p80, %p81
      %p84 = scmp.ne.s32.totalorder %s69, %s83
      %p85 = scmp.eq.s32.totalorder %s17, 0
      %p86 = por %p84, %p85
      %s88 = sadd.s32 %s87, 1
      %p91 = scmp.eq.s32.totalorder %s11, 1
      %p92 = scmp.ne.s32.totalorder %s87, %s89
      %p93 = scmp.eq.s32.totalorder %s11, 0
      %p94 = por %p92, %p93
      %p95 = scmp.ne.s32.totalorder %s87, %s89
      %p96 = scmp.eq.s32.totalorder %s16, 1
      %p97 = por %p95, %p96
      %p98 = scmp.ne.s32.totalorder %s89, %s90
      %p99 = scmp.eq.s32.totalorder %s16, 0
      %p100 = por %p98, %p99
      %p101 = scmp.ne.s32.totalorder %s89, %s90
      %p102 = scmp.eq.s32.totalorder %s17, 1
      %p103 = por %p101, %p102
      %p105 = scmp.ne.s32.totalorder %s90, %s104
      %p106 = scmp.eq.s32.totalorder %s17, 0
      %p107 = por %p105, %p106
      %s108 = ssub.s32 %s11, %s18
      %p109 = scmp.eq.s32.totalorder %s108, 0
      %s111 = sadd.s32 %s110, 1
      %s112 = scalar_select %p109, %s110, %s111
      %p115 = pneg %p109
      %p116 = scmp.eq.s32.totalorder %s11, 1
      %p117 = por %p115, %p116
      %p118 = scmp.ne.s32.totalorder %s110, %s113
      %p119 = scmp.eq.s32.totalorder %s11, 0
      %p120 = por %p118, %p119
      %p121 = scmp.ne.s32.totalorder %s110, %s113
      %p122 = scmp.eq.s32.totalorder %s16, 1
      %p123 = por %p121, %p122
      %p124 = scmp.ne.s32.totalorder %s113, %s114
      %p125 = scmp.eq.s32.totalorder %s16, 0
      %p126 = por %p124, %p125
      %p127 = scmp.ne.s32.totalorder %s113, %s114
      %p128 = scmp.eq.s32.totalorder %s17, 1
      %p129 = por %p127, %p128
      %p131 = scmp.ne.s32.totalorder %s114, %s130
      %p132 = scmp.eq.s32.totalorder %s17, 0
      %p133 = por %p131, %p132
      %p134 = scmp.le.s32.totalorder 1, %s11
      %p135 = scmp.lt.s32.totalorder %s11, 3
      %p136 = pnand %p134, %p135
      %p137 = pneg %p136
      // Predicated region
      $region9: #{simple_model_forward.1} parent=5 // pred_check
        _
      $region10: #{simple_model_forward.1} parent=5 // pred_check_branch
        %139 = sbr.rel (%p136) target = $region12
      $region11: #{simple_model_forward.1} parent=5 // pred_region
        %s140 = ssub.s32 %s11, 1
        // Predicated region
        $region13: #{simple_model_forward.1} parent=11 // pred_check
          %p141 = pneg %p58
        $region14: #{simple_model_forward.1} parent=11 // pred_check_branch
          %143 = sbr.rel (%p141) target = $region16
        $region15: #{simple_model_forward.1} parent=11 // pred_region
          _
        $region16: #{simple_model_forward.1} parent=11 // pred_fallthru
          _
        // Predicated region
        $region17: #{simple_model_forward.1} parent=11 // pred_check
          %p144 = pneg %p79
        $region18: #{simple_model_forward.1} parent=11 // pred_check_branch
          %146 = sbr.rel (%p144) target = $region20
        $region19: #{simple_model_forward.1} parent=11 // pred_region
          %s148 = ssub.s32 1024, 1024
          %149 = vsyncadd [#allocation3], %s148
          %s150 = sshll.u32 [#allocation2], 4
          %s151 = int_to_ptr.vmem [resolvable:$true] %s150
          %156 = dma.hbm_to_vmem [thread:$0]  %s2, 1024, %s151, [#allocation3], 64, 64, 4
        $region20: #{simple_model_forward.1} parent=11 // pred_fallthru
          _
        // Predicated region
        $region21: #{simple_model_forward.1} parent=11 // pred_check
          %p157 = pneg %p100
        $region22: #{simple_model_forward.1} parent=11 // pred_check_branch
          %159 = sbr.rel (%p157) target = $region24
        $region23: #{simple_model_forward.1} parent=11 // pred_region
          _
        $region24: #{simple_model_forward.1} parent=11 // pred_fallthru
          _
      $region12: #{simple_model_forward.1} parent=5 // pred_fallthru
        _
      %p160 = scmp.lt.s32.totalorder %s11, 2
      // Predicated region
      $region25: #{simple_model_forward.1} parent=5 // pred_check
        %p161 = pneg %p160
      $region26: #{simple_model_forward.1} parent=5 // pred_check_branch
        %163 = sbr.rel (%p161) target = $region28
      $region27: #{simple_model_forward.1} parent=5 // pred_region
        // Predicated region
        $region29: #{simple_model_forward.1} parent=27 // pred_check
          %p164 = pneg %p31
        $region30: #{simple_model_forward.1} parent=27 // pred_check_branch
          %166 = sbr.rel (%p164) target = $region32
        $region31: #{simple_model_forward.1} parent=27 // pred_region
          %s167 = smul.u32 2, %s11
          %p168 = scmp.lt.s32.totalorder %s167, 3
          %s169 = scalar_select %p168, %s167, 3
          %s170 = smul.addr %s169, 8
          %s171 = scalar_lea.vmem %s0, %s170
          %s172 = smul.u32 2, %s11
        $region32: #{simple_model_forward.1} parent=27 // pred_fallthru
          _
      $region28: #{simple_model_forward.1} parent=5 // pred_fallthru
        _
      %p173 = scmp.le.s32.totalorder 1, %s11
      %p174 = scmp.lt.s32.totalorder %s11, 3
      %p175 = pnand %p173, %p174
      %p176 = pneg %p175
      // Predicated region
      $region33: #{simple_model_forward.1} parent=5 // pred_check
        _
      $region34: #{simple_model_forward.1} parent=5 // pred_check_branch
        %178 = sbr.rel (%p175) target = $region36
      $region35: #{simple_model_forward.1} parent=5 // pred_region
        %s179 = ssub.s32 %s11, 1
        // Predicated region
        $region37: #{simple_model_forward.1} parent=35 // pred_check
          %p180 = pneg %p79
        $region38: #{simple_model_forward.1} parent=35 // pred_check_branch
          %182 = sbr.rel (%p180) target = $region40
        $region39: #{simple_model_forward.1} parent=35 // pred_region
          %183 = dma.done [#allocation3], 1024
        $region40: #{simple_model_forward.1} parent=35 // pred_fallthru
          _
        %s184 = smul.u32 2, %s16
        %p185 = scmp.lt.s32.totalorder %s184, 3
        %s186 = scalar_select %p185, %s184, 3
        %s187 = smul.addr %s186, 8
        %s188 = scalar_lea.vmem %s0, %s187
        %p189 = pneg %p37
        %p190 = pneg %p34
        %p191 = pneg %p58
        %p192 = pneg %p55
        %p193 = pneg %p79
        %p194 = pneg %p76
        %p195 = pneg %p100
        %p196 = pneg %p97
        %p197 = pneg %p126
        %p198 = pneg %p123
        %s199 = smul.u32 2, %s16
        %p200 = scmp.lt.s32.totalorder %s199, 3
        %s201 = scalar_select %p200, %s199, 3
        %s202 = smul.addr %s201, 8
        %s203 = scalar_lea.vmem %s4, %s202
        %s204 = smul.u32 2, %s16
        %p205 = scmp.lt.s32.totalorder %s204, 3
        %s206 = scalar_select %p205, %s204, 3
        %s207 = smul.addr %s206, 8
        %s208 = scalar_lea.vmem %s0, %s207
        %s209 = smul.u32 2, %s16
        %s210 = smul.u32 2, %s16
        %p211 = scmp.lt.s32.totalorder %s210, 3
        %s212 = scalar_select %p211, %s210, 3
        %s213 = smul.addr %s212, 8
        %s214 = scalar_lea.vmem %s4, %s213
        %s215 = smul.u32 2, %s16
        %v217 = vld [vmem:[%s208] sm:$0xff]
        %v218 = vld [vmem:[%s208 + $0x8] sm:$0xff]
        %v219 = vlaneseq
        %v220 = vand.u32 %v219, 127
        %221 = vset.pattern.permute.xlu0 0
        %222 = vperm.xlu0 %221, %v217
        %v223 = vpop.permute.xlu0 %222
        %224 = vset.pattern.permute.xlu0 0
        %225 = vperm.xlu0 %224, %v218
        %v226 = vpop.permute.xlu0 %225
        %vm227 = vcmp.eq.s32.totalorder %v220, %v223
        %vm228 = vcmp.eq.s32.totalorder %v220, %v226
        %v229 = vsel %vm227, 1, 0
        %v230 = vsel %vm228, 1, 0
        %v231 = vcvt.s32.f32 %v229
        %v232 = vcvt.s32.f32 %v230
        %v233 = vpack.c.bf16 %v232, %v231
        %v234 = vld [vmem:[%s1] sm:$0xf]
        %v235 = vld [vmem:[%s1 + $0x4] sm:$0xf]
        %v236 = vld [vmem:[%s1 + $0x8] sm:$0xf]
        %v237 = vld [vmem:[%s1 + $0xc] sm:$0xf]
        %v238 = vld [vmem:[%s1 + $0x10] sm:$0xf]
        %v239 = vld [vmem:[%s1 + $0x14] sm:$0xf]
        %v240 = vld [vmem:[%s1 + $0x18] sm:$0xf]
        %v241 = vld [vmem:[%s1 + $0x1c] sm:$0xf]
        %v242 = vld [vmem:[%s1 + $0x20] sm:$0xf]
        %v243 = vld [vmem:[%s1 + $0x24] sm:$0xf]
        %v244 = vld [vmem:[%s1 + $0x28] sm:$0xf]
        %v245 = vld [vmem:[%s1 + $0x2c] sm:$0xf]
        %v246 = vld [vmem:[%s1 + $0x30] sm:$0xf]
        %v247 = vld [vmem:[%s1 + $0x34] sm:$0xf]
        %v248 = vld [vmem:[%s1 + $0x38] sm:$0xf]
        %v249 = vld [vmem:[%s1 + $0x3c] sm:$0xf]
        %v266 = vunpack.c.l.b16 %v234
        %v267 = vunpack.c.l.b16 %v235
        %v268 = vunpack.c.l.b16 %v236
        %v269 = vunpack.c.l.b16 %v237
        %v270 = vunpack.c.l.b16 %v238
        %v271 = vunpack.c.l.b16 %v239
        %v272 = vunpack.c.l.b16 %v240
        %v273 = vunpack.c.l.b16 %v241
        %v274 = vunpack.c.l.b16 %v242
        %v275 = vunpack.c.l.b16 %v243
        %v276 = vunpack.c.l.b16 %v244
        %v277 = vunpack.c.l.b16 %v245
        %v278 = vunpack.c.l.b16 %v246
        %v279 = vunpack.c.l.b16 %v247
        %v280 = vunpack.c.l.b16 %v248
        %v281 = vunpack.c.l.b16 %v249
        %v282 = vpack.c.b16 %v267, %v266
        %v283 = vpack.c.b16 %v269, %v268
        %v284 = vpack.c.b16 %v271, %v270
        %v285 = vpack.c.b16 %v273, %v272
        %v286 = vpack.c.b16 %v275, %v274
        %v287 = vpack.c.b16 %v277, %v276
        %v288 = vpack.c.b16 %v279, %v278
        %v289 = vpack.c.b16 %v281, %v280
        %298 = vmatprep.subr.bf16.mxu0 0
        %299 = vmatpush1.bf16.msra.mxu0 %v282
        %300 = vmatprep.subr.bf16.mxu0 0
        %301 = vmatpush1.bf16.msra.mxu0 %v283
        %302 = vmatprep.subr.bf16.mxu0 0
        %303 = vmatpush1.bf16.msra.mxu0 %v284
        %304 = vmatprep.subr.bf16.mxu0 0
        %305 = vmatpush1.bf16.msra.mxu0 %v285
        %306 = vmatprep.subr.bf16.mxu0 0
        %307 = vmatpush1.bf16.msra.mxu0 %v286
        %308 = vmatprep.subr.bf16.mxu0 0
        %309 = vmatpush1.bf16.msra.mxu0 %v287
        %310 = vmatprep.subr.bf16.mxu0 0
        %311 = vmatpush1.bf16.msra.mxu0 %v288
        %312 = vmatprep.subr.bf16.mxu0 0
        %313 = vmatpush1.bf16.msra.mxu0 %v289
        %314 = vmatprep.subr.bf16.mxu0 0
        %315 = vmatpush1.bf16.msra.mxu0 0
        %316 = vmatprep.subr.bf16.mxu0 0
        %317 = vmatpush1.bf16.msra.mxu0 0
        %318 = vmatprep.subr.bf16.mxu0 0
        %319 = vmatpush1.bf16.msra.mxu0 0
        %320 = vmatprep.subr.bf16.mxu0 0
        %321 = vmatpush1.bf16.msra.mxu0 0
        %322 = vmatprep.subr.bf16.mxu0 0
        %323 = vmatpush1.bf16.msra.mxu0 0
        %324 = vmatprep.subr.bf16.mxu0 0
        %325 = vmatpush1.bf16.msra.mxu0 0
        %326 = vmatprep.subr.bf16.mxu0 0
        %327 = vmatpush1.bf16.msra.mxu0 0
        %328 = vmatprep.subr.bf16.mxu0 0
        %329 = vmatpush1.bf16.msra.mxu0 0
        %330 = vmatprep.mubr.bf16.mxu0 0
        %331 = vmatmul.mubr.bf16.gmra.mrb[0].mxu0 %v233
        %v332 = vpop.f32.mrb[0].mxu0
        %v333 = vadd.f32 0.0, %v332
        %v334 = vpop.f32.mrb[0].mxu0
        %v335 = vpop.f32.mrb[0].mxu0
        %v336 = vadd.f32 0.0, %v335
        %v337 = vpop.f32.mrb[0].mxu0
        %338 = vdwg.mxu0
        %v339 = vmax.f32 %v333, 0.0
        %v340 = vmax.f32 %v336, 0.0
        %v341 = vpack.c.bf16 %v340, %v339
        %v342 = vld [vmem:[#allocation2] sm:$0xf]
        %v343 = vld [vmem:[#allocation2 + $0x4] sm:$0xf]
        %v344 = vld [vmem:[#allocation2 + $0x8] sm:$0xf]
        %v345 = vld [vmem:[#allocation2 + $0xc] sm:$0xf]
        %v346 = vld [vmem:[#allocation2 + $0x10] sm:$0xf]
        %v347 = vld [vmem:[#allocation2 + $0x14] sm:$0xf]
        %v348 = vld [vmem:[#allocation2 + $0x18] sm:$0xf]
        %v349 = vld [vmem:[#allocation2 + $0x1c] sm:$0xf]
        %v350 = vld [vmem:[#allocation2 + $0x20] sm:$0xf]
        %v351 = vld [vmem:[#allocation2 + $0x24] sm:$0xf]
        %v352 = vld [vmem:[#allocation2 + $0x28] sm:$0xf]
        %v353 = vld [vmem:[#allocation2 + $0x2c] sm:$0xf]
        %v354 = vld [vmem:[#allocation2 + $0x30] sm:$0xf]
        %v355 = vld [vmem:[#allocation2 + $0x34] sm:$0xf]
        %v356 = vld [vmem:[#allocation2 + $0x38] sm:$0xf]
        %v357 = vld [vmem:[#allocation2 + $0x3c] sm:$0xf]
        %v358 = vld [vmem:[%s3] sm:$0x1]
        %v360 = vlaneseq
        %v361 = vshrl.u32 %v360, 7
        %v362 = vsub.s32 0, %v361
        %v363 = vrot.slane %v358, %v362
        %v381 = vunpack.c.l.b16 %v342
        %v382 = vunpack.c.l.b16 %v343
        %v383 = vunpack.c.l.b16 %v344
        %v384 = vunpack.c.l.b16 %v345
        %v385 = vunpack.c.l.b16 %v346
        %v386 = vunpack.c.l.b16 %v347
        %v387 = vunpack.c.l.b16 %v348
        %v388 = vunpack.c.l.b16 %v349
        %v389 = vunpack.c.l.b16 %v350
        %v390 = vunpack.c.l.b16 %v351
        %v391 = vunpack.c.l.b16 %v352
        %v392 = vunpack.c.l.b16 %v353
        %v393 = vunpack.c.l.b16 %v354
        %v394 = vunpack.c.l.b16 %v355
        %v395 = vunpack.c.l.b16 %v356
        %v396 = vunpack.c.l.b16 %v357
        %v397 = vpack.c.b16 %v382, %v381
        %v398 = vpack.c.b16 %v384, %v383
        %v399 = vpack.c.b16 %v386, %v385
        %v400 = vpack.c.b16 %v388, %v387
        %v401 = vpack.c.b16 %v390, %v389
        %v402 = vpack.c.b16 %v392, %v391
        %v403 = vpack.c.b16 %v394, %v393
        %v404 = vpack.c.b16 %v396, %v395
        %413 = vmatprep.subr.bf16.mxu0 0
        %414 = vmatpush1.bf16.msra.mxu0 %v397
        %415 = vmatprep.subr.bf16.mxu0 0
        %416 = vmatpush1.bf16.msra.mxu0 %v398
        %417 = vmatprep.subr.bf16.mxu0 0
        %418 = vmatpush1.bf16.msra.mxu0 %v399
        %419 = vmatprep.subr.bf16.mxu0 0
        %420 = vmatpush1.bf16.msra.mxu0 %v400
        %421 = vmatprep.subr.bf16.mxu0 0
        %422 = vmatpush1.bf16.msra.mxu0 %v401
        %423 = vmatprep.subr.bf16.mxu0 0
        %424 = vmatpush1.bf16.msra.mxu0 %v402
        %425 = vmatprep.subr.bf16.mxu0 0
        %426 = vmatpush1.bf16.msra.mxu0 %v403
        %427 = vmatprep.subr.bf16.mxu0 0
        %428 = vmatpush1.bf16.msra.mxu0 %v404
        %429 = vmatprep.subr.bf16.mxu0 0
        %430 = vmatpush1.bf16.msra.mxu0 0
        %431 = vmatprep.subr.bf16.mxu0 0
        %432 = vmatpush1.bf16.msra.mxu0 0
        %433 = vmatprep.subr.bf16.mxu0 0
        %434 = vmatpush1.bf16.msra.mxu0 0
        %435 = vmatprep.subr.bf16.mxu0 0
        %436 = vmatpush1.bf16.msra.mxu0 0
        %437 = vmatprep.subr.bf16.mxu0 0
        %438 = vmatpush1.bf16.msra.mxu0 0
        %439 = vmatprep.subr.bf16.mxu0 0
        %440 = vmatpush1.bf16.msra.mxu0 0
        %441 = vmatprep.subr.bf16.mxu0 0
        %442 = vmatpush1.bf16.msra.mxu0 0
        %443 = vmatprep.subr.bf16.mxu0 0
        %444 = vmatpush1.bf16.msra.mxu0 0
        %445 = vmatprep.mubr.bf16.mxu0 0
        %446 = vmatmul.mubr.bf16.gmra.mrb[0].mxu0 %v341
        %v447 = vpop.f32.mrb[0].mxu0
        %v448 = vadd.f32 %v363, %v447
        %v449 = vpop.f32.mrb[0].mxu0
        %v450 = vpop.f32.mrb[0].mxu0
        %v451 = vadd.f32 %v363, %v450
        %v452 = vpop.f32.mrb[0].mxu0
        %453 = vdwg.mxu0
        %454 = vst [vmem:[%s214] sm:$0xff] %v448
        %455 = vst [vmem:[%s214 + $0x8] sm:$0xff] %v451
        %s456 = smul.u32 2, %s16
        %p457 = scmp.lt.s32.totalorder %s456, 3
        %s458 = scalar_select %p457, %s456, 3
        %s459 = smul.addr %s458, 8
        %s460 = scalar_lea.vmem %s4, %s459
        // Predicated region
        $region41: #{simple_model_forward.1} parent=35 // pred_check
          %p461 = pneg %p123
        $region42: #{simple_model_forward.1} parent=35 // pred_check_branch
          %463 = sbr.rel (%p461) target = $region44
        $region43: #{simple_model_forward.1} parent=35 // pred_region
          %s464 = smul.u32 2, %s16
        $region44: #{simple_model_forward.1} parent=35 // pred_fallthru
          _
      $region36: #{simple_model_forward.1} parent=5 // pred_fallthru
        _
      %p465 = scmp.le.s32.totalorder 2, %s11
      // Predicated region
      $region45: #{simple_model_forward.1} parent=5 // pred_check
        %p466 = pneg %p465
      $region46: #{simple_model_forward.1} parent=5 // pred_check_branch
        %468 = sbr.rel (%p466) target = $region48
      $region47: #{simple_model_forward.1} parent=5 // pred_region
        %s469 = ssub.s32 %s11, 2
        // Predicated region
        $region49: #{simple_model_forward.1} parent=47 // pred_check
          %p470 = pneg %p129
        $region50: #{simple_model_forward.1} parent=47 // pred_check_branch
          %472 = sbr.rel (%p470) target = $region52
        $region51: #{simple_model_forward.1} parent=47 // pred_region
          %s473 = smul.u32 2, %s17
          %p474 = scmp.lt.s32.totalorder %s473, 3
          %s475 = scalar_select %p474, %s473, 3
          %s476 = smul.addr %s475, 8
          %s477 = scalar_lea.vmem %s4, %s476
        $region52: #{simple_model_forward.1} parent=47 // pred_fallthru
          _
      $region48: #{simple_model_forward.1} parent=5 // pred_fallthru
        _
    $region6: #{simple_model_forward.1} parent=1 // loop_footer
      %s15 = sadd.s32 1, %s11
    $region7: #{simple_model_forward.1} parent=1 // loop_footer_branch
      %10 = sbr.rel target = $region3
    $region8: #{simple_model_forward.1} parent=1 // loop_exit
      _
    %478 = vsyncpa [#allocation3], 1
    %s479 = scalar_lea.sflag [#allocation3], 1
    %480 = vsyncpa %s479, 1

</llo_original>
